<compile_context>
chip_gen: v7x
topology: tpu7x:2x2x1
jax: 0.10.0
libtpu: 0.0.40
codegen_flags: <defaults>
</compile_context>

<pallas_src>
import functools

import jax
import jax.numpy as jnp
from jax.experimental import pallas as pl
from jax.experimental.pallas import tpu as pltpu


def _round_up(x, m):
    return (x + m - 1) // m * m


def _block_kernel(p_ref, w_ref, o_ref, acc_ref, *, inv_p):
    # p_ref:   (1, P, Kt)   bf16 im2col patches for one batch element, K-tile k
    # w_ref:   (Kt, C_pad)  bf16 flattened conv weights, K-tile k
    # o_ref:   (1, P, C_pad) f32 output (block index constant over k -> resident)
    # acc_ref: (P, C_pad)   f32 accumulator scratch
    k = pl.program_id(1)

    @pl.when(k == 0)
    def _():
        acc_ref[...] = jnp.zeros_like(acc_ref)

    acc_ref[...] += jnp.dot(
        p_ref[0], w_ref[...], preferred_element_type=jnp.float32)

    @pl.when(k == pl.num_programs(1) - 1)
    def _():
        acc = acc_ref[...]                                  # (P, C_pad) f32
        # InstanceNorm2d: per-channel moments over the P spatial positions,
        # computed in a single pass (biased variance, eps=1e-5).
        s = jnp.sum(acc, axis=0, keepdims=True)             # (1, C_pad)
        s2 = jnp.sum(acc * acc, axis=0, keepdims=True)      # (1, C_pad)
        mean = s * inv_p
        var = s2 * inv_p - mean * mean
        y = (acc - mean) * jax.lax.rsqrt(var + 1e-5)
        # LeakyReLU(0.2)
        y = jnp.where(y >= 0, y, 0.2 * y)
        o_ref[0] = y.astype(o_ref.dtype)


def block_forward(x, weight, bias, stride):
    """x: (N, C_in, H, W) NCHW f32. weight: (C_out, C_in, 4, 4). bias: (C_out,).

    Returns (N, C_out, H_out, W_out) f32, matching the PyTorch Block forward.
    """
    del bias  # Exactly cancelled by InstanceNorm(affine=False) mean subtraction.

    N, C_in, H, W = x.shape
    C_out, _, kh, kw = weight.shape
    assert (kh, kw) == (4, 4)

    # --- glue in plain JAX: reflect pad + im2col (K ordering = c, ki, kj) ---
    xp = jnp.pad(x, ((0, 0), (0, 0), (1, 1), (1, 1)), mode="reflect")
    Hp, Wp = H + 2, W + 2
    Ho = (Hp - kh) // stride + 1
    Wo = (Wp - kw) // stride + 1

    cols = []
    for i in range(kh):
        for j in range(kw):
            cols.append(xp[:, :, i:i + stride * Ho:stride, j:j + stride * Wo:stride])
    p = jnp.stack(cols, axis=2)                       # (N, C_in, kh*kw, Ho, Wo)
    p = p.transpose(0, 3, 4, 1, 2).reshape(N, Ho * Wo, C_in * kh * kw)

    P = Ho * Wo
    K = C_in * kh * kw
    C_pad = _round_up(C_out, 128)                     # lane-dense output / MXU N

    # --- choose the K tile so the double-buffered working set fits VMEM ---
    def vmem_bytes(kt):
        return (2 * P * kt * 2            # patches, bf16, double buffered
                + 2 * kt * C_pad * 2      # weights, bf16, double buffered
                + 2 * P * C_pad * 4       # f32 output block
                + P * C_pad * 4)          # f32 accumulator scratch

    budget = 40 * 1024 * 1024             # conservative for v7x (64 MiB VMEM)
    Kt = 512 if K > 512 else _round_up(K, 128)
    while vmem_bytes(Kt) > budget and Kt > 128:
        Kt = _round_up(Kt // 2, 128)
    K_pad = _round_up(K, Kt)              # guarantees K_pad % Kt == 0

    # Pad K (zero contributions) and cast to bf16 for the native MXU path.
    p = jnp.pad(p, ((0, 0), (0, 0), (0, K_pad - K))).astype(jnp.bfloat16)
    w_mat = weight.reshape(C_out, K).T                # (K, C_out), (c, i, j) order
    w_mat = jnp.pad(
        w_mat, ((0, K_pad - K), (0, C_pad - C_out))).astype(jnp.bfloat16)

    vmem_limit = min(max(vmem_bytes(Kt) + (4 << 20), 16 << 20), 48 << 20)

    out = pl.pallas_call(
        functools.partial(_block_kernel, inv_p=1.0 / P),
        out_shape=jax.ShapeDtypeStruct((N, P, C_pad), jnp.float32),
        grid_spec=pltpu.PrefetchScalarGridSpec(
            num_scalar_prefetch=0,
            grid=(N, K_pad // Kt),
            in_specs=[
                pl.BlockSpec((1, P, Kt), lambda n, k: (n, 0, k)),
                pl.BlockSpec((Kt, C_pad), lambda n, k: (k, 0)),
            ],
            out_specs=pl.BlockSpec((1, P, C_pad), lambda n, k: (n, 0, 0)),
            scratch_shapes=[pltpu.VMEM((P, C_pad), jnp.float32)],
        ),
        compiler_params=pltpu.CompilerParams(
            dimension_semantics=("parallel", "arbitrary"),
            vmem_limit_bytes=vmem_limit,
        ),
    )(p, w_mat)

    # Strip channel padding, restore NCHW to match the PyTorch module output.
    y = out[:, :, :C_out]
    return y.reshape(N, Ho, Wo, C_out).transpose(0, 3, 1, 2)


if __name__ == "__main__":
    # Small shapes consistent with the module.
    N, C_in, C_out, H, W, stride = 2, 4, 8, 16, 16, 2

    key = jax.random.PRNGKey(0)
    kx, kw_, kb = jax.random.split(key, 3)
    x = jax.random.normal(kx, (N, C_in, H, W), dtype=jnp.float32)
    weight = jax.random.normal(kw_, (C_out, C_in, 4, 4), dtype=jnp.float32) * 0.1
    bias = jax.random.normal(kb, (C_out,), dtype=jnp.float32) * 0.1

    y = block_forward(x, weight, bias, stride)
    jax.block_until_ready(y)
    assert y.shape == (N, C_out, H // stride, W // stride), y.shape
    assert bool(jnp.all(jnp.isfinite(y)))
    print("KERNEL_OK")
</pallas_src>

<mosaic_0001>
module attributes {stable_mosaic.version = 11 : i64} {
  func.func @_block_kernel(%arg0: i32, %arg1: i32, %arg2: memref<1x64x128xbf16, #tpu.memory_space<vmem>>, %arg3: memref<128x128xbf16, #tpu.memory_space<vmem>>, %arg4: memref<1x64x128xf32, #tpu.memory_space<vmem>>, %arg5: memref<64x128xf32, #tpu.memory_space<vmem>>) attributes {dimension_semantics = [#tpu.dimension_semantics<parallel>, #tpu.dimension_semantics<arbitrary>], iteration_bounds = array<i64: 2, 1>, scalar_prefetch = 0 : i64, scratch_operands = 1 : i64, tpu.core_type = #tpu.core_type<tc>, window_params = [{transform_indices = @transform_0, window_bounds = array<i64: 1, 64, 128>}, {transform_indices = @transform_1, window_bounds = array<i64: 128, 128>}, {transform_indices = @transform_2, window_bounds = array<i64: 1, 64, 128>}]} {
    %c0_i32 = arith.constant 0 : i32
    %0 = arith.cmpi eq, %arg1, %c0_i32 : i32
    %1 = arith.extui %0 : i1 to i32
    %c0_i32_0 = arith.constant 0 : i32
    %2 = arith.cmpi ne, %1, %c0_i32_0 : i32
    scf.if %2 {
      %cst_11 = arith.constant 0.000000e+00 : f32
      %13 = vector.broadcast %cst_11 : f32 to vector<64x128xf32>
      %c0_12 = arith.constant 0 : index
      %c0_13 = arith.constant 0 : index
      %14 = vector.load %arg5[%c0_12, %c0_13] : memref<64x128xf32, #tpu.memory_space<vmem>>, vector<64x128xf32>
      tpu.vector_store %arg5[%c0_12, %c0_13], %13 {strides = array<i32>} : memref<64x128xf32, #tpu.memory_space<vmem>>, vector<64x128xf32>,
    } else {
    }
    %c0 = arith.constant 0 : index
    %c0_1 = arith.constant 0 : index
    %3 = vector.load %arg5[%c0, %c0_1] : memref<64x128xf32, #tpu.memory_space<vmem>>, vector<64x128xf32>
    %c0_2 = arith.constant 0 : index
    %c0_3 = arith.constant 0 : index
    %c0_4 = arith.constant 0 : index
    %4 = vector.load %arg2[%c0_2, %c0_3, %c0_4] : memref<1x64x128xbf16, #tpu.memory_space<vmem>>, vector<1x64x128xbf16>
    %5 = vector.shape_cast %4 : vector<1x64x128xbf16> to vector<64x128xbf16>
    %c0_5 = arith.constant 0 : index
    %c0_6 = arith.constant 0 : index
    %6 = vector.load %arg3[%c0_5, %c0_6] : memref<128x128xbf16, #tpu.memory_space<vmem>>, vector<128x128xbf16>
    %cst = arith.constant dense<0.000000e+00> : vector<64x128xf32>
    %7 = tpu.matmul %5, %6, %cst {dimension_numbers = #tpu.dot_dimension_numbers<[1], [0], [0], [1], [0, 0, 1, 1], [], []>} : vector<64x128xbf16>, vector<128x128xbf16>, vector<64x128xf32> -> vector<64x128xf32>
    %8 = arith.addf %3, %7 : vector<64x128xf32>
    %c0_7 = arith.constant 0 : index
    %c0_8 = arith.constant 0 : index
    %9 = vector.load %arg5[%c0_7, %c0_8] : memref<64x128xf32, #tpu.memory_space<vmem>>, vector<64x128xf32>
    tpu.vector_store %arg5[%c0_7, %c0_8], %8 {strides = array<i32>} : memref<64x128xf32, #tpu.memory_space<vmem>>, vector<64x128xf32>,
    %c0_i32_9 = arith.constant 0 : i32
    %10 = arith.cmpi eq, %arg1, %c0_i32_9 : i32
    %11 = arith.extui %10 : i1 to i32
    %c0_i32_10 = arith.constant 0 : i32
    %12 = arith.cmpi ne, %11, %c0_i32_10 : i32
    scf.if %12 {
      %c0_11 = arith.constant 0 : index
      %c0_12 = arith.constant 0 : index
      %13 = vector.load %arg5[%c0_11, %c0_12] : memref<64x128xf32, #tpu.memory_space<vmem>>, vector<64x128xf32>
      %cst_13 = arith.constant dense<0.000000e+00> : vector<128xf32>
      %14 = vector.multi_reduction <add>, %13, %cst_13 [0] : vector<64x128xf32> to vector<128xf32>
      %15 = vector.shape_cast %14 : vector<128xf32> to vector<1x128xf32>
      %16 = arith.mulf %13, %13 : vector<64x128xf32>
      %cst_14 = arith.constant dense<0.000000e+00> : vector<128xf32>
      %17 = vector.multi_reduction <add>, %16, %cst_14 [0] : vector<64x128xf32> to vector<128xf32>
      %18 = vector.shape_cast %17 : vector<128xf32> to vector<1x128xf32>
      %cst_15 = arith.constant 1.562500e-02 : f32
      %19 = vector.broadcast %cst_15 : f32 to vector<1x128xf32>
      %20 = arith.mulf %15, %19 : vector<1x128xf32>
      %cst_16 = arith.constant 1.562500e-02 : f32
      %21 = vector.broadcast %cst_16 : f32 to vector<1x128xf32>
      %22 = arith.mulf %18, %21 : vector<1x128xf32>
      %23 = arith.mulf %20, %20 : vector<1x128xf32>
      %24 = arith.subf %22, %23 : vector<1x128xf32>
      %25 = vector.broadcast %20 : vector<1x128xf32> to vector<64x128xf32>
      %26 = arith.subf %13, %25 : vector<64x128xf32>
      %cst_17 = arith.constant 9.99999974E-6 : f32
      %27 = vector.broadcast %cst_17 : f32 to vector<1x128xf32>
      %28 = arith.addf %24, %27 : vector<1x128xf32>
      %29 = math.rsqrt %28 : vector<1x128xf32>
      %30 = vector.broadcast %29 : vector<1x128xf32> to vector<64x128xf32>
      %31 = arith.mulf %26, %30 : vector<64x128xf32>
      %cst_18 = arith.constant 0.000000e+00 : f32
      %32 = vector.broadcast %cst_18 : f32 to vector<64x128xf32>
      %33 = arith.cmpf oge, %31, %32 : vector<64x128xf32>
      %cst_19 = arith.constant 2.000000e-01 : f32
      %34 = vector.broadcast %cst_19 : f32 to vector<64x128xf32>
      %35 = arith.mulf %34, %31 : vector<64x128xf32>
      %36 = arith.select %33, %31, %35 : vector<64x128xi1>, vector<64x128xf32>
      %c0_20 = arith.constant 0 : index
      %c0_21 = arith.constant 0 : index
      %c0_22 = arith.constant 0 : index
      %37 = vector.load %arg4[%c0_20, %c0_21, %c0_22] : memref<1x64x128xf32, #tpu.memory_space<vmem>>, vector<1x64x128xf32>
      %38 = vector.shape_cast %37 : vector<1x64x128xf32> to vector<64x128xf32>
      %39 = vector.shape_cast %36 : vector<64x128xf32> to vector<1x64x128xf32>
      tpu.vector_store %arg4[%c0_20, %c0_21, %c0_22], %39 {strides = array<i32>} : memref<1x64x128xf32, #tpu.memory_space<vmem>>, vector<1x64x128xf32>,
    } else {
    }
    return
  }
  func.func @transform_0(%arg0: i32, %arg1: i32) -> (i32, i32, i32) {
    %c0_i32 = arith.constant 0 : i32
    %c0_i32_0 = arith.constant 0 : i32
    return %arg0, %c0_i32, %arg1 : i32, i32, i32
  }
  func.func @transform_1(%arg0: i32, %arg1: i32) -> (i32, i32) {
    %c0_i32 = arith.constant 0 : i32
    %c0_i32_0 = arith.constant 0 : i32
    return %arg1, %c0_i32 : i32, i32
  }
  func.func @transform_2(%arg0: i32, %arg1: i32) -> (i32, i32, i32) {
    %c0_i32 = arith.constant 0 : i32
    %c0_i32_0 = arith.constant 0 : i32
    %c0_i32_1 = arith.constant 0 : i32
    return %arg0, %c0_i32, %c0_i32_0 : i32, i32, i32
  }
}

</mosaic_0001>

<llo_original>
// kernel: tpu_custom_call.1
$region0: #{tpu_custom_call.1}
  #allocation0 [shape = 'u32[]', space=smem, size = 0x4, offset = 0x4, fixed_abs, tag = 'smem constant byte address 0x4 - core index']
  #allocation1 [shape = 'u32[144,128]{1,0:T(1,128)}', space=vmem, size = 0x12000, scoped, tag = 'internal scratch']
  #allocation2 [shape = 'f32[64,128]{1,0:T(8,128)}', space=vmem, size = 0x8000, scoped, tag = 'scratch operand']
  %s0 = inlined_call_operand.hbm [shape: bf16[2,64,128], index: 0, kind: input, shape index: {}]
  %s1 = inlined_call_operand.hbm [shape: bf16[128,128], index: 1, kind: input, shape index: {}]
  %s2 = inlined_call_operand.hbm [shape: f32[2,64,128], index: 2, kind: output, shape index: {}]
  %s3 = sld [smem:[#allocation0]]
  $region57: #{tpu_custom_call.1} parent=0
    _
  %s5 = ssub.s32 1, %s3
  %s6 = scalar_select 0, %s5, %s3
  $region1: #{tpu_custom_call.1} parent=0
    #allocation3 [shape = 'u8[32768]{0}', space=vmem, size = 0x8000, scoped, tag = 'input window, operand 0']
    #allocation4 [shape = 's32[2]{0}', space=sflag, size = 0x8, scoped, tag = 'scoped memory for tpu_custom_call.1']
    #allocation5 [shape = 's32[2]{0}', space=sflag, size = 0x8, scoped, tag = 'scoped memory for tpu_custom_call.1']
    #allocation6 [shape = 'u8[32768]{0}', space=vmem, size = 0x8000, scoped, tag = 'input window, operand 1, single buffered']
    #allocation7 [shape = 's32[1]{0}', space=sflag, size = 0x4, scoped, tag = 'scoped memory for tpu_custom_call.1']
    #allocation8 [shape = 'u8[65536]{0}', space=vmem, size = 0x10000, scoped, tag = 'output window, operand 0']
    %7 = vsyncpa [#allocation4], 0
    %s8 = scalar_lea.sflag [#allocation4], 1
    %9 = vsyncpa %s8, 0
    %10 = vsyncpa [#allocation7], 0
    %11 = vsyncpa [#allocation5], 0
    %s12 = scalar_lea.sflag [#allocation5], 1
    %13 = vsyncpa %s12, 0
    loop: start=0, step=1, limit=4
    $region2: #{tpu_custom_call.1} parent=1 // loop_pre_header
      _
    $region3: #{tpu_custom_call.1} parent=1 // loop_header
      %s15 = sphi 0, %s19
      %p16 = scmp.ge.s32.totalorder %s15, 4
      %s22 = sphi 0, %s34
      %s23 = sphi 0, %s30
      %s24 = sphi 0, %s22
      %s25 = sphi 0, %s23
      %s26 = sphi 0, %s24
      %s27 = sphi 0, %s25
      %s39 = sphi 0, %s41
      %s42 = sphi 0, %s39
      %s43 = sphi 0, %s42
      %s59 = sphi 0, %s43
      %s65 = sphi 0, %s67
      %s68 = sphi 0, %s65
      %s69 = sphi 0, %s68
      %s85 = sphi 0, %s69
      %s91 = sphi 0, %s93
      %s94 = sphi 0, %s91
      %s95 = sphi 0, %s94
      %s111 = sphi 0, %s95
    $region4: #{tpu_custom_call.1} parent=1 // loop_header_branch
      %18 = sbr.rel (%p16) target = $region8
    $region5: #{tpu_custom_call.1} parent=1 // loop_body
      %s20 = ssub.s32 %s15, 1
      %s21 = ssub.s32 %s15, 2
      %s28 = sadd.s32 1, %s23
      %p29 = scmp.ge.s32.totalorder %s28, 1
      %s30 = scalar_select %p29, 0, %s28
      %s31 = sadd.s32 1, %s22
      %s32 = scalar_select %p29, %s31, %s22
      %p33 = scmp.ge.s32.totalorder %s32, 2
      %s34 = scalar_select %p33, 0, %s32
      %s35 = ssub.s32 %s22, %s34
      %s36 = ssub.s32 %s23, %s30
      %s37 = sor.u32 %s35, %s36
      %p38 = scmp.eq.s32.totalorder %s37, 0
      %s40 = sadd.s32 %s39, 1
      %s41 = scalar_select %p38, %s39, %s40
      %p44 = pneg %p38
      %p45 = scmp.eq.s32.totalorder %s15, 1
      %p46 = por %p44, %p45
      %p47 = scmp.ne.s32.totalorder %s39, %s42
      %p48 = scmp.eq.s32.totalorder %s15, 0
      %p49 = por %p47, %p48
      %p50 = scmp.ne.s32.totalorder %s39, %s42
      %p51 = scmp.eq.s32.totalorder %s20, 1
      %p52 = por %p50, %p51
      %p53 = scmp.ne.s32.totalorder %s42, %s43
      %p54 = scmp.eq.s32.totalorder %s20, 0
      %p55 = por %p53, %p54
      %p56 = scmp.ne.s32.totalorder %s42, %s43
      %p57 = scmp.eq.s32.totalorder %s21, 1
      %p58 = por %p56, %p57
      %p60 = scmp.ne.s32.totalorder %s43, %s59
      %p61 = scmp.eq.s32.totalorder %s21, 0
      %p62 = por %p60, %p61
      %s63 = ssub.s32 %s23, %s30
      %p64 = scmp.eq.s32.totalorder %s63, 0
      %s66 = sadd.s32 %s65, 1
      %s67 = scalar_select %p64, %s65, %s66
      %p70 = pneg %p64
      %p71 = scmp.eq.s32.totalorder %s15, 1
      %p72 = por %p70, %p71
      %p73 = scmp.ne.s32.totalorder %s65, %s68
      %p74 = scmp.eq.s32.totalorder %s15, 0
      %p75 = por %p73, %p74
      %p76 = scmp.ne.s32.totalorder %s65, %s68
      %p77 = scmp.eq.s32.totalorder %s20, 1
      %p78 = por %p76, %p77
      %p79 = scmp.ne.s32.totalorder %s68, %s69
      %p80 = scmp.eq.s32.totalorder %s20, 0
      %p81 = por %p79, %p80
      %p82 = scmp.ne.s32.totalorder %s68, %s69
      %p83 = scmp.eq.s32.totalorder %s21, 1
      %p84 = por %p82, %p83
      %p86 = scmp.ne.s32.totalorder %s69, %s85
      %p87 = scmp.eq.s32.totalorder %s21, 0
      %p88 = por %p86, %p87
      %s89 = ssub.s32 %s22, %s34
      %p90 = scmp.eq.s32.totalorder %s89, 0
      %s92 = sadd.s32 %s91, 1
      %s93 = scalar_select %p90, %s91, %s92
      %p96 = pneg %p90
      %p97 = scmp.eq.s32.totalorder %s15, 1
      %p98 = por %p96, %p97
      %p99 = scmp.ne.s32.totalorder %s91, %s94
      %p100 = scmp.eq.s32.totalorder %s15, 0
      %p101 = por %p99, %p100
      %p102 = scmp.ne.s32.totalorder %s91, %s94
      %p103 = scmp.eq.s32.totalorder %s20, 1
      %p104 = por %p102, %p103
      %p105 = scmp.ne.s32.totalorder %s94, %s95
      %p106 = scmp.eq.s32.totalorder %s20, 0
      %p107 = por %p105, %p106
      %p108 = scmp.ne.s32.totalorder %s94, %s95
      %p109 = scmp.eq.s32.totalorder %s21, 1
      %p110 = por %p108, %p109
      %p112 = scmp.ne.s32.totalorder %s95, %s111
      %p113 = scmp.eq.s32.totalorder %s21, 0
      %p114 = por %p112, %p113
      %p115 = scmp.le.s32.totalorder 1, %s15
      %p116 = scmp.lt.s32.totalorder %s15, 3
      %p117 = pnand %p115, %p116
      %p118 = pneg %p117
      // Predicated region
      $region9: #{tpu_custom_call.1} parent=5 // pred_check
        _
      $region10: #{tpu_custom_call.1} parent=5 // pred_check_branch
        %120 = sbr.rel (%p117) target = $region12
      $region11: #{tpu_custom_call.1} parent=5 // pred_region
        %s121 = ssub.s32 %s15, 1
        // Predicated region
        $region13: #{tpu_custom_call.1} parent=11 // pred_check
          %p122 = pneg %p81
        $region14: #{tpu_custom_call.1} parent=11 // pred_check_branch
          %124 = sbr.rel (%p122) target = $region16
        $region15: #{tpu_custom_call.1} parent=11 // pred_region
          %s125 = smul.u32 16, %s25
          %s127 = ssub.s32 1024, 1024
          %128 = vsyncadd [#allocation7], %s127
          %s129 = smul.addr %s125, 64
          %s130 = scalar_lea.hbm %s1, %s129
          %s131 = sshll.u32 [#allocation6], 4
          %s132 = int_to_ptr.vmem [resolvable:$true] %s131
          %137 = dma.hbm_to_vmem [thread:$0]  %s130, 1024, %s132, [#allocation7], 64, 64, 4
        $region16: #{tpu_custom_call.1} parent=11 // pred_fallthru
          _
      $region12: #{tpu_custom_call.1} parent=5 // pred_fallthru
        _
      %p138 = scmp.lt.s32.totalorder %s15, 2
      // Predicated region
      $region17: #{tpu_custom_call.1} parent=5 // pred_check
        %p139 = pneg %p138
      $region18: #{tpu_custom_call.1} parent=5 // pred_check_branch
        %141 = sbr.rel (%p139) target = $region20
      $region19: #{tpu_custom_call.1} parent=5 // pred_region
        // Predicated region
        $region21: #{tpu_custom_call.1} parent=19 // pred_check
          %p142 = pneg %p49
        $region22: #{tpu_custom_call.1} parent=19 // pred_check_branch
          %144 = sbr.rel (%p142) target = $region24
        $region23: #{tpu_custom_call.1} parent=19 // pred_region
          %s145 = sand.u32 %s39, 1
          %s146 = scalar_lea.sflag [#allocation4], %s145
          %s147 = sand.u32 %s39, 1
          %s148 = smul.addr %s147, 32
          %s149 = scalar_lea.vmem [#allocation3], %s148
          %s151 = ssub.s32 512, 512
          %152 = vsyncadd %s146, %s151
          %s153 = smul.addr %s22, 8
          %s154 = sadd.s32 %s23, %s153
          %s155 = smul.addr %s154, 64
          %s156 = scalar_lea.hbm %s0, %s155
          %s157 = sshll.u32 %s149, 4
          %s158 = int_to_ptr.vmem [resolvable:$true] %s157
          %163 = dma.hbm_to_vmem [thread:$0]  %s156, 512, %s158, %s146, 64, 64, 4
        $region24: #{tpu_custom_call.1} parent=19 // pred_fallthru
          _
      $region20: #{tpu_custom_call.1} parent=5 // pred_fallthru
        _
      %p164 = scmp.le.s32.totalorder 1, %s15
      %p165 = scmp.lt.s32.totalorder %s15, 3
      %p166 = pnand %p164, %p165
      %p167 = pneg %p166
      // Predicated region
      $region25: #{tpu_custom_call.1} parent=5 // pred_check
        _
      $region26: #{tpu_custom_call.1} parent=5 // pred_check_branch
        %169 = sbr.rel (%p166) target = $region28
      $region27: #{tpu_custom_call.1} parent=5 // pred_region
        %s170 = ssub.s32 %s15, 1
        %s171 = sand.u32 %s42, 1
        %s172 = scalar_lea.sflag [#allocation4], %s171
        %s173 = sand.u32 %s42, 1
        %s174 = smul.addr %s173, 32
        %s175 = scalar_lea.vmem [#allocation3], %s174
        // Predicated region
        $region29: #{tpu_custom_call.1} parent=27 // pred_check
          %p176 = pneg %p55
        $region30: #{tpu_custom_call.1} parent=27 // pred_check_branch
          %178 = sbr.rel (%p176) target = $region32
        $region31: #{tpu_custom_call.1} parent=27 // pred_region
          %179 = dma.done %s172, 512
        $region32: #{tpu_custom_call.1} parent=27 // pred_fallthru
          _
        // Predicated region
        $region33: #{tpu_custom_call.1} parent=27 // pred_check
          %p180 = pneg %p81
        $region34: #{tpu_custom_call.1} parent=27 // pred_check_branch
          %182 = sbr.rel (%p180) target = $region36
        $region35: #{tpu_custom_call.1} parent=27 // pred_region
          %183 = dma.done [#allocation7], 1024
        $region36: #{tpu_custom_call.1} parent=27 // pred_fallthru
          _
        %s184 = sand.u32 %s42, 1
        %s185 = scalar_lea.sflag [#allocation4], %s184
        %s186 = sand.u32 %s42, 1
        %s187 = smul.addr %s186, 32
        %s188 = scalar_lea.vmem [#allocation3], %s187
        %p189 = pneg %p55
        %p190 = pneg %p52
        %p191 = pneg %p81
        %p192 = pneg %p78
        %p193 = pneg %p107
        %p194 = pneg %p104
        %s195 = sand.u32 %s94, 1
        %s196 = scalar_lea.sflag [#allocation5], %s195
        %s197 = sand.u32 %s94, 1
        %s198 = smul.addr %s197, 64
        %s199 = scalar_lea.vmem [#allocation8], %s198
        %s200 = smul.u32 16, %s25
        %p202 = scmp.eq.s32.totalorder %s25, 0
        // Predicated region
        $region37: #{tpu_custom_call.1} parent=27 // pred_check
          %p203 = pneg %p202
        $region38: #{tpu_custom_call.1} parent=27 // pred_check_branch
          %205 = sbr.rel (%p203) target = $region40
        $region39: #{tpu_custom_call.1} parent=27 // pred_region
          %206 = vst [vmem:[#allocation2] sm:$0xff] 0.0
          %207 = vst [vmem:[#allocation2 + $0x8] sm:$0xff] 0.0
          %208 = vst [vmem:[#allocation2 + $0x10] sm:$0xff] 0.0
          %209 = vst [vmem:[#allocation2 + $0x18] sm:$0xff] 0.0
          %210 = vst [vmem:[#allocation2 + $0x20] sm:$0xff] 0.0
          %211 = vst [vmem:[#allocation2 + $0x28] sm:$0xff] 0.0
          %212 = vst [vmem:[#allocation2 + $0x30] sm:$0xff] 0.0
          %213 = vst [vmem:[#allocation2 + $0x38] sm:$0xff] 0.0
        $region40: #{tpu_custom_call.1} parent=27 // pred_fallthru
          _
        %v214 = vld [vmem:[#allocation2] sm:$0xff]
        %v215 = vld [vmem:[#allocation2 + $0x8] sm:$0xff]
        %v216 = vld [vmem:[#allocation2 + $0x10] sm:$0xff]
        %v217 = vld [vmem:[#allocation2 + $0x18] sm:$0xff]
        %v218 = vld [vmem:[#allocation2 + $0x20] sm:$0xff]
        %v219 = vld [vmem:[#allocation2 + $0x28] sm:$0xff]
        %v220 = vld [vmem:[#allocation2 + $0x30] sm:$0xff]
        %v221 = vld [vmem:[#allocation2 + $0x38] sm:$0xff]
        %v222 = vld [vmem:[%s175] sm:$0xf]
        %v223 = vld [vmem:[%s175 + $0x4] sm:$0xf]
        %v224 = vld [vmem:[%s175 + $0x8] sm:$0xf]
        %v225 = vld [vmem:[%s175 + $0xc] sm:$0xf]
        %v226 = vld [vmem:[%s175 + $0x10] sm:$0xf]
        %v227 = vld [vmem:[%s175 + $0x14] sm:$0xf]
        %v228 = vld [vmem:[%s175 + $0x18] sm:$0xf]
        %v229 = vld [vmem:[%s175 + $0x1c] sm:$0xf]
        %v230 = vld [vmem:[#allocation6] sm:$0xf]
        %v231 = vld [vmem:[#allocation6 + $0x4] sm:$0xf]
        %v232 = vld [vmem:[#allocation6 + $0x8] sm:$0xf]
        %v233 = vld [vmem:[#allocation6 + $0xc] sm:$0xf]
        %v234 = vld [vmem:[#allocation6 + $0x10] sm:$0xf]
        %v235 = vld [vmem:[#allocation6 + $0x14] sm:$0xf]
        %v236 = vld [vmem:[#allocation6 + $0x18] sm:$0xf]
        %v237 = vld [vmem:[#allocation6 + $0x1c] sm:$0xf]
        %v238 = vld [vmem:[#allocation6 + $0x20] sm:$0xf]
        %v239 = vld [vmem:[#allocation6 + $0x24] sm:$0xf]
        %v240 = vld [vmem:[#allocation6 + $0x28] sm:$0xf]
        %v241 = vld [vmem:[#allocation6 + $0x2c] sm:$0xf]
        %v242 = vld [vmem:[#allocation6 + $0x30] sm:$0xf]
        %v243 = vld [vmem:[#allocation6 + $0x34] sm:$0xf]
        %v244 = vld [vmem:[#allocation6 + $0x38] sm:$0xf]
        %v245 = vld [vmem:[#allocation6 + $0x3c] sm:$0xf]
        %v254 = vunpack.c.l.b16 %v222
        %v255 = vunpack.c.l.b16 %v223
        %v256 = vunpack.c.l.b16 %v224
        %v257 = vunpack.c.l.b16 %v225
        %v258 = vunpack.c.l.b16 %v226
        %v259 = vunpack.c.l.b16 %v227
        %v260 = vunpack.c.l.b16 %v228
        %v261 = vunpack.c.l.b16 %v229
        %v262 = vpack.c.b16 %v255, %v254
        %v263 = vpack.c.b16 %v257, %v256
        %v264 = vpack.c.b16 %v259, %v258
        %v265 = vpack.c.b16 %v261, %v260
        %v286 = vunpack.c.l.b16 %v230
        %v287 = vunpack.c.l.b16 %v231
        %v288 = vunpack.c.l.b16 %v232
        %v289 = vunpack.c.l.b16 %v233
        %v290 = vunpack.c.l.b16 %v234
        %v291 = vunpack.c.l.b16 %v235
        %v292 = vunpack.c.l.b16 %v236
        %v293 = vunpack.c.l.b16 %v237
        %v294 = vunpack.c.l.b16 %v238
        %v295 = vunpack.c.l.b16 %v239
        %v296 = vunpack.c.l.b16 %v240
        %v297 = vunpack.c.l.b16 %v241
        %v298 = vunpack.c.l.b16 %v242
        %v299 = vunpack.c.l.b16 %v243
        %v300 = vunpack.c.l.b16 %v244
        %v301 = vunpack.c.l.b16 %v245
        %v302 = vpack.c.b16 %v287, %v286
        %v303 = vpack.c.b16 %v289, %v288
        %v304 = vpack.c.b16 %v291, %v290
        %v305 = vpack.c.b16 %v293, %v292
        %v306 = vpack.c.b16 %v295, %v294
        %v307 = vpack.c.b16 %v297, %v296
        %v308 = vpack.c.b16 %v299, %v298
        %v309 = vpack.c.b16 %v301, %v300
        %318 = vmatprep.subr.bf16.mxu0 0
        %319 = vmatpush1.bf16.msra.mxu0 %v302
        %320 = vmatprep.subr.bf16.mxu0 0
        %321 = vmatpush1.bf16.msra.mxu0 %v303
        %322 = vmatprep.subr.bf16.mxu0 0
        %323 = vmatpush1.bf16.msra.mxu0 %v304
        %324 = vmatprep.subr.bf16.mxu0 0
        %325 = vmatpush1.bf16.msra.mxu0 %v305
        %326 = vmatprep.subr.bf16.mxu0 0
        %327 = vmatpush1.bf16.msra.mxu0 %v306
        %328 = vmatprep.subr.bf16.mxu0 0
        %329 = vmatpush1.bf16.msra.mxu0 %v307
        %330 = vmatprep.subr.bf16.mxu0 0
        %331 = vmatpush1.bf16.msra.mxu0 %v308
        %332 = vmatprep.subr.bf16.mxu0 0
        %333 = vmatpush1.bf16.msra.mxu0 %v309
        %334 = vmatprep.subr.bf16.mxu0 0
        %335 = vmatpush1.bf16.msra.mxu0 0
        %336 = vmatprep.subr.bf16.mxu0 0
        %337 = vmatpush1.bf16.msra.mxu0 0
        %338 = vmatprep.subr.bf16.mxu0 0
        %339 = vmatpush1.bf16.msra.mxu0 0
        %340 = vmatprep.subr.bf16.mxu0 0
        %341 = vmatpush1.bf16.msra.mxu0 0
        %342 = vmatprep.subr.bf16.mxu0 0
        %343 = vmatpush1.bf16.msra.mxu0 0
        %344 = vmatprep.subr.bf16.mxu0 0
        %345 = vmatpush1.bf16.msra.mxu0 0
        %346 = vmatprep.subr.bf16.mxu0 0
        %347 = vmatpush1.bf16.msra.mxu0 0
        %348 = vmatprep.subr.bf16.mxu0 0
        %349 = vmatpush1.bf16.msra.mxu0 0
        %350 = vmatprep.mubr.bf16.mxu0 0
        %351 = vmatmul.mubr.bf16.gmra.mrb[0].mxu0 %v262
        %v352 = vpop.f32.mrb[0].mxu0
        %v353 = vadd.f32 0.0, %v352
        %v354 = vpop.f32.mrb[0].mxu0
        %v355 = vpop.f32.mrb[0].mxu0
        %v356 = vadd.f32 0.0, %v355
        %v357 = vpop.f32.mrb[0].mxu0
        %358 = vmatprep.mubr.bf16.mxu0 0
        %359 = vmatmul.mubr.bf16.gmra.mrb[0].mxu0 %v263
        %v360 = vpop.f32.mrb[0].mxu0
        %v361 = vadd.f32 0.0, %v360
        %v362 = vpop.f32.mrb[0].mxu0
        %v363 = vpop.f32.mrb[0].mxu0
        %v364 = vadd.f32 0.0, %v363
        %v365 = vpop.f32.mrb[0].mxu0
        %366 = vmatprep.mubr.bf16.mxu0 0
        %367 = vmatmul.mubr.bf16.gmra.mrb[0].mxu0 %v264
        %v368 = vpop.f32.mrb[0].mxu0
        %v369 = vadd.f32 0.0, %v368
        %v370 = vpop.f32.mrb[0].mxu0
        %v371 = vpop.f32.mrb[0].mxu0
        %v372 = vadd.f32 0.0, %v371
        %v373 = vpop.f32.mrb[0].mxu0
        %374 = vmatprep.mubr.bf16.mxu0 0
        %375 = vmatmul.mubr.bf16.gmra.mrb[0].mxu0 %v265
        %v376 = vpop.f32.mrb[0].mxu0
        %v377 = vadd.f32 0.0, %v376
        %v378 = vpop.f32.mrb[0].mxu0
        %v379 = vpop.f32.mrb[0].mxu0
        %v380 = vadd.f32 0.0, %v379
        %v381 = vpop.f32.mrb[0].mxu0
        %382 = vdwg.mxu0
        %v383 = vadd.f32 %v214, %v353
        %v384 = vadd.f32 %v215, %v356
        %v385 = vadd.f32 %v216, %v361
        %v386 = vadd.f32 %v217, %v364
        %v387 = vadd.f32 %v218, %v369
        %v388 = vadd.f32 %v219, %v372
        %v389 = vadd.f32 %v220, %v377
        %v390 = vadd.f32 %v221, %v380
        %391 = vst [vmem:[#allocation2] sm:$0xff] %v383
        %392 = vst [vmem:[#allocation2 + $0x8] sm:$0xff] %v384
        %393 = vst [vmem:[#allocation2 + $0x10] sm:$0xff] %v385
        %394 = vst [vmem:[#allocation2 + $0x18] sm:$0xff] %v386
        %395 = vst [vmem:[#allocation2 + $0x20] sm:$0xff] %v387
        %396 = vst [vmem:[#allocation2 + $0x28] sm:$0xff] %v388
        %397 = vst [vmem:[#allocation2 + $0x30] sm:$0xff] %v389
        %398 = vst [vmem:[#allocation2 + $0x38] sm:$0xff] %v390
        // Predicated region
        $region41: #{tpu_custom_call.1} parent=27 // pred_check
          %p399 = pneg %p202
        $region42: #{tpu_custom_call.1} parent=27 // pred_check_branch
          %401 = sbr.rel (%p399) target = $region44
        $region43: #{tpu_custom_call.1} parent=27 // pred_region
          %v402 = vld [vmem:[#allocation2] sm:$0xff]
          %v403 = vld [vmem:[#allocation2 + $0x8] sm:$0xff]
          %v404 = vld [vmem:[#allocation2 + $0x10] sm:$0xff]
          %v405 = vld [vmem:[#allocation2 + $0x18] sm:$0xff]
          %v406 = vld [vmem:[#allocation2 + $0x20] sm:$0xff]
          %v407 = vld [vmem:[#allocation2 + $0x28] sm:$0xff]
          %v408 = vld [vmem:[#allocation2 + $0x30] sm:$0xff]
          %v409 = vld [vmem:[#allocation2 + $0x38] sm:$0xff]
          %v410 = vadd.f32 %v402, %v403
          %v411 = vadd.f32 %v410, %v404
          %v412 = vadd.f32 %v411, %v405
          %v413 = vadd.f32 %v412, %v406
          %v414 = vadd.f32 %v413, %v407
          %v415 = vadd.f32 %v414, %v408
          %v416 = vadd.f32 %v415, %v409
          %v417 = vrot.slane %v416, 4
          %v418 = vadd.f32 %v416, %v417
          %v419 = vrot.slane %v418, 2
          %v420 = vadd.f32 %v418, %v419
          %v421 = vrot.slane %v420, 1
          %v422 = vadd.f32 %v420, %v421
          %v423 = vmul.f32 %v402, %v402
          %v424 = vmul.f32 %v403, %v403
          %v425 = vmul.f32 %v404, %v404
          %v426 = vmul.f32 %v405, %v405
          %v427 = vmul.f32 %v406, %v406
          %v428 = vmul.f32 %v407, %v407
          %v429 = vmul.f32 %v408, %v408
          %v430 = vmul.f32 %v409, %v409
          %v431 = vadd.f32 %v423, %v424
          %v432 = vadd.f32 %v431, %v425
          %v433 = vadd.f32 %v432, %v426
          %v434 = vadd.f32 %v433, %v427
          %v435 = vadd.f32 %v434, %v428
          %v436 = vadd.f32 %v435, %v429
          %v437 = vadd.f32 %v436, %v430
          %v438 = vrot.slane %v437, 4
          %v439 = vadd.f32 %v437, %v438
          %v440 = vrot.slane %v439, 2
          %v441 = vadd.f32 %v439, %v440
          %v442 = vrot.slane %v441, 1
          %v443 = vadd.f32 %v441, %v442
          %v444 = vmul.f32 %v422, 0.015625
          %v445 = vmul.f32 %v443, 0.015625
          %v446 = vmul.f32 %v444, %v444
          %v447 = vsub.f32 %v445, %v446
          %v448 = vsub.f32 %v402, %v444
          %v449 = vsub.f32 %v403, %v444
          %v450 = vsub.f32 %v404, %v444
          %v451 = vsub.f32 %v405, %v444
          %v452 = vsub.f32 %v406, %v444
          %v453 = vsub.f32 %v407, %v444
          %v454 = vsub.f32 %v408, %v444
          %v455 = vsub.f32 %v409, %v444
          %v456 = vadd.f32 %v447, 1e-05
          %v457 = vrsqrt.pop %v456
          %v458 = vmul.f32 %v448, %v457
          %v459 = vmul.f32 %v449, %v457
          %v460 = vmul.f32 %v450, %v457
          %v461 = vmul.f32 %v451, %v457
          %v462 = vmul.f32 %v452, %v457
          %v463 = vmul.f32 %v453, %v457
          %v464 = vmul.f32 %v454, %v457
          %v465 = vmul.f32 %v455, %v457
          %vm466 = vcmp.ge.f32.partialorder %v458, 0.0
          %vm467 = vcmp.ge.f32.partialorder %v459, 0.0
          %vm468 = vcmp.ge.f32.partialorder %v460, 0.0
          %vm469 = vcmp.ge.f32.partialorder %v461, 0.0
          %vm470 = vcmp.ge.f32.partialorder %v462, 0.0
          %vm471 = vcmp.ge.f32.partialorder %v463, 0.0
          %vm472 = vcmp.ge.f32.partialorder %v464, 0.0
          %vm473 = vcmp.ge.f32.partialorder %v465, 0.0
          %v474 = vmul.f32 %v458, 0.2
          %v475 = vmul.f32 %v459, 0.2
          %v476 = vmul.f32 %v460, 0.2
          %v477 = vmul.f32 %v461, 0.2
          %v478 = vmul.f32 %v462, 0.2
          %v479 = vmul.f32 %v463, 0.2
          %v480 = vmul.f32 %v464, 0.2
          %v481 = vmul.f32 %v465, 0.2
          %v482 = vsel %vm466, %v458, %v474
          %v483 = vsel %vm467, %v459, %v475
          %v484 = vsel %vm468, %v460, %v476
          %v485 = vsel %vm469, %v461, %v477
          %v486 = vsel %vm470, %v462, %v478
          %v487 = vsel %vm471, %v463, %v479
          %v488 = vsel %vm472, %v464, %v480
          %v489 = vsel %vm473, %v465, %v481
          %490 = vst [vmem:[%s199] sm:$0xff] %v482
          %491 = vst [vmem:[%s199 + $0x8] sm:$0xff] %v483
          %492 = vst [vmem:[%s199 + $0x10] sm:$0xff] %v484
          %493 = vst [vmem:[%s199 + $0x18] sm:$0xff] %v485
          %494 = vst [vmem:[%s199 + $0x20] sm:$0xff] %v486
          %495 = vst [vmem:[%s199 + $0x28] sm:$0xff] %v487
          %496 = vst [vmem:[%s199 + $0x30] sm:$0xff] %v488
          %497 = vst [vmem:[%s199 + $0x38] sm:$0xff] %v489
        $region44: #{tpu_custom_call.1} parent=27 // pred_fallthru
          _
        %s498 = sand.u32 %s94, 1
        %s499 = scalar_lea.sflag [#allocation5], %s498
        %s500 = sand.u32 %s94, 1
        %s501 = smul.addr %s500, 64
        %s502 = scalar_lea.vmem [#allocation8], %s501
        // Predicated region
        $region45: #{tpu_custom_call.1} parent=27 // pred_check
          %p503 = pneg %p104
        $region46: #{tpu_custom_call.1} parent=27 // pred_check_branch
          %505 = sbr.rel (%p503) target = $region48
        $region47: #{tpu_custom_call.1} parent=27 // pred_region
          %s507 = ssub.s32 1024, 1024
          %508 = vsyncadd %s499, %s507
          %s509 = smul.addr %s24, 8
          %s510 = smul.addr %s509, 128
          %s511 = scalar_lea.hbm %s2, %s510
          %s512 = sshll.u32 %s502, 4
          %s513 = int_to_ptr.vmem [resolvable:$true] %s512
          %518 = dma.vmem_to_hbm [thread:$0]  %s513, 1024, %s511, %s499, 128, 128, 8
        $region48: #{tpu_custom_call.1} parent=27 // pred_fallthru
          _
      $region28: #{tpu_custom_call.1} parent=5 // pred_fallthru
        _
      %p519 = scmp.le.s32.totalorder 2, %s15
      // Predicated region
      $region49: #{tpu_custom_call.1} parent=5 // pred_check
        %p520 = pneg %p519
      $region50: #{tpu_custom_call.1} parent=5 // pred_check_branch
        %522 = sbr.rel (%p520) target = $region52
      $region51: #{tpu_custom_call.1} parent=5 // pred_region
        %s523 = ssub.s32 %s15, 2
        // Predicated region
        $region53: #{tpu_custom_call.1} parent=51 // pred_check
          %p524 = pneg %p110
        $region54: #{tpu_custom_call.1} parent=51 // pred_check_branch
          %526 = sbr.rel (%p524) target = $region56
        $region55: #{tpu_custom_call.1} parent=51 // pred_region
          %s527 = sand.u32 %s95, 1
          %s528 = scalar_lea.sflag [#allocation5], %s527
          %s529 = sand.u32 %s95, 1
          %s530 = smul.addr %s529, 64
          %s531 = scalar_lea.vmem [#allocation8], %s530
          %532 = dma.done %s528, 1024
        $region56: #{tpu_custom_call.1} parent=51 // pred_fallthru
          _
      $region52: #{tpu_custom_call.1} parent=5 // pred_fallthru
        _
    $region6: #{tpu_custom_call.1} parent=1 // loop_footer
      %s19 = sadd.s32 1, %s15
    $region7: #{tpu_custom_call.1} parent=1 // loop_footer_branch
      %14 = sbr.rel target = $region3
    $region8: #{tpu_custom_call.1} parent=1 // loop_exit
      _
    %533 = vsyncpa [#allocation4], 1
    %s534 = scalar_lea.sflag [#allocation4], 1
    %535 = vsyncpa %s534, 1
    %536 = vsyncpa [#allocation7], 1
    %537 = vsyncpa [#allocation5], 1
    %s538 = scalar_lea.sflag [#allocation5], 1
    %539 = vsyncpa %s538, 1

</llo_original>
